<compile_context>
chip_gen: v7x
topology: tpu7x:2x2x1
jax: 0.10.0
libtpu: 0.0.40
codegen_flags: <defaults>
</compile_context>

<pallas_src>
import functools

import jax
import jax.numpy as jnp
from jax.experimental import pallas as pl
from jax.experimental.pallas import tpu as pltpu


# Matmul input dtype. Set to jnp.bfloat16 on v6e / v7x for ~2x MXU throughput
# and half the weight/activation DMA bytes (accumulation stays f32 via
# preferred_element_type; GLU / sigmoid math stays f32). Keep f32 for exact
# parity with the PyTorch reference and on v5e.
MXU_DTYPE = jnp.float32


def _mm(a, b):
    return jnp.dot(a.astype(MXU_DTYPE), b.astype(MXU_DTYPE),
                   preferred_element_type=jnp.float32)


# ---------------------------------------------------------------------------
# Kernel 1: pointwise linear (Linear2d == 1x1 conv) with optional ReLU,
# row-tiled so the memory-bound projection pipelines over HBM.
# ---------------------------------------------------------------------------
def _linear_kernel(x_ref, w_ref, b_ref, o_ref, *, apply_relu):
    y = _mm(x_ref[...], w_ref[...]) + b_ref[...]
    if apply_relu:
        y = jnp.maximum(y, 0.0)
    o_ref[...] = y


def linear2d(x, w, b, *, relu, tile_m=512):
    """(M, Cin) @ (Cin, Cout) + b  (equivalent to a 1x1 conv over channels)."""
    M, Cin = x.shape
    Cout = w.shape[1]
    tm = tile_m if M % tile_m == 0 else M
    return pl.pallas_call(
        functools.partial(_linear_kernel, apply_relu=relu),
        out_shape=jax.ShapeDtypeStruct((M, Cout), jnp.float32),
        grid=(M // tm,),
        in_specs=[
            pl.BlockSpec((tm, Cin), lambda i: (i, 0)),
            pl.BlockSpec((Cin, Cout), lambda i: (0, 0)),
            pl.BlockSpec((1, Cout), lambda i: (0, 0)),
        ],
        out_specs=pl.BlockSpec((tm, Cout), lambda i: (i, 0)),
        compiler_params=pltpu.CompilerParams(
            dimension_semantics=("parallel",)),
    )(x, w, b.reshape(1, Cout))


# ---------------------------------------------------------------------------
# Kernel 2: one STSGCL layer.  Grid iterates over the T-2 sliding windows
# ("parallel": each window writes its own output block).  Activation layout is
# (T, N, B*h) -> the graph hop is a single (3N,3N) @ (3N, B*h) matmul; the
# feature transform is done per batch with static lane slices (contraction h).
# ---------------------------------------------------------------------------
def _stsgcl_kernel(x0_ref, x1_ref, x2_ref, t0_ref, t1_ref, t2_ref, s_ref,
                   a_ref, wl_ref, wr_ref, bl_ref, br_ref, o_ref, *,
                   n_series, batch, h_dim, gcn_depth, act):
    N, B, hd = n_series, batch, h_dim
    s_emb = s_ref[0]                                    # (N, B*h)
    x0 = x0_ref[0] + t0_ref[0] + s_emb                  # embeddings fused here
    x1 = x1_ref[0] + t1_ref[0] + s_emb
    x2 = x2_ref[0] + t2_ref[0] + s_emb
    h = jnp.concatenate([x0, x1, x2], axis=0)           # (3N, B*h) window
    A = a_ref[...]                                      # (3N, 3N), no kron

    pooled = None
    for k in range(gcn_depth):
        ax = _mm(A, h)                                  # (3N, B*h) graph hop
        wl = wl_ref[0, k]                               # (h, h)
        bl = bl_ref[0, k]                               # (1, h)
        if act == "glu":
            wr = wr_ref[0, k]
            br = br_ref[0, k]
        per_b = []
        for b in range(B):                              # static unrolled loop
            axb = ax[:, b * hd:(b + 1) * hd]            # (3N, h)
            zl = _mm(axb, wl) + bl
            if act == "glu":
                zr = _mm(axb, wr) + br
                per_b.append(zl * jax.nn.sigmoid(zr))   # GLU (f32)
            else:  # 'relu'
                per_b.append(jnp.maximum(zl, 0.0))
        h = jnp.concatenate(per_b, axis=1)              # (3N, B*h)
        crop = h[N:2 * N, :]                            # middle time step
        pooled = crop if pooled is None else jnp.maximum(pooled, crop)
    o_ref[0] = pooled                                   # (N, B*h)


def stsgcl_layer(x3, temb, semb, A, wl, wr, bl, br, *, T, n_series, batch,
                 gcn_depth, h_dim, act):
    N, B, hd = n_series, batch, h_dim
    Bh = B * hd
    T_out = T - 2
    kernel = functools.partial(
        _stsgcl_kernel, n_series=N, batch=B, h_dim=hd,
        gcn_depth=gcn_depth, act=act)
    return pl.pallas_call(
        kernel,
        out_shape=jax.ShapeDtypeStruct((T_out, N, Bh), jnp.float32),
        grid=(T_out,),
        in_specs=[
            # three time-shifted activation blocks -> only the 3-step window
            # is resident / pipelined, not the whole (T, N, B*h) array
            pl.BlockSpec((1, N, Bh), lambda i: (i, 0, 0)),
            pl.BlockSpec((1, N, Bh), lambda i: (i + 1, 0, 0)),
            pl.BlockSpec((1, N, Bh), lambda i: (i + 2, 0, 0)),
            # matching temporal embeddings (tiny)
            pl.BlockSpec((1, 1, Bh), lambda i: (i, 0, 0)),
            pl.BlockSpec((1, 1, Bh), lambda i: (i + 1, 0, 0)),
            pl.BlockSpec((1, 1, Bh), lambda i: (i + 2, 0, 0)),
            # spatial embedding (resident)
            pl.BlockSpec((1, N, Bh), lambda i: (0, 0, 0)),
            # masked localized ST adjacency (3N, 3N), resident
            pl.BlockSpec((3 * N, 3 * N), lambda i: (0, 0)),
            # per-window STSGCM weights
            pl.BlockSpec((1, gcn_depth, hd, hd), lambda i: (i, 0, 0, 0)),
            pl.BlockSpec((1, gcn_depth, hd, hd), lambda i: (i, 0, 0, 0)),
            pl.BlockSpec((1, gcn_depth, 1, hd), lambda i: (i, 0, 0, 0)),
            pl.BlockSpec((1, gcn_depth, 1, hd), lambda i: (i, 0, 0, 0)),
        ],
        out_specs=pl.BlockSpec((1, N, Bh), lambda i: (i, 0, 0)),
        compiler_params=pltpu.CompilerParams(
            # windows are independent -> shardable across v7x's 2 TensorCores
            dimension_semantics=("parallel",),
            # explicit budget that fits v7x's 64 MiB VMEM with double-buffer
            # headroom at real STSGCN sizes (N~200, B~32, h~64)
            vmem_limit_bytes=48 * 1024 * 1024),
    )(x3, x3, x3, temb, temb, temb, semb, A, wl, wr, bl, br)


# ---------------------------------------------------------------------------
# Kernel 3: fused output heads.  One lane-dense kernel over row tiles of
# (B*N, D): hidden = relu(x @ W1_packed + b1) with W1_packed (D, Q*128), then
# y = hidden @ W2_blockdiag + b2 with W2_blockdiag (Q*128, Q) -> output (BN,Q).
# ---------------------------------------------------------------------------
def _head_kernel(x_ref, w1_ref, b1_ref, w2_ref, b2_ref, o_ref):
    y = _mm(x_ref[...], w1_ref[...]) + b1_ref[...]      # (tm, Q*128)
    y = jnp.maximum(y, 0.0)
    y = _mm(y, w2_ref[...]) + b2_ref[...]               # (tm, Q)
    o_ref[...] = y


def output_heads(xo, w1p, b1p, w2bd, b2p, *, tile_m=256):
    M, D = xo.shape
    QH = w1p.shape[1]
    Q = w2bd.shape[1]
    tm = tile_m if M % tile_m == 0 else M
    return pl.pallas_call(
        _head_kernel,
        out_shape=jax.ShapeDtypeStruct((M, Q), jnp.float32),
        grid=(M // tm,),
        in_specs=[
            pl.BlockSpec((tm, D), lambda i: (i, 0)),
            pl.BlockSpec((D, QH), lambda i: (0, 0)),
            pl.BlockSpec((1, QH), lambda i: (0, 0)),
            pl.BlockSpec((QH, Q), lambda i: (0, 0)),
            pl.BlockSpec((1, Q), lambda i: (0, 0)),
        ],
        out_specs=pl.BlockSpec((tm, Q), lambda i: (i, 0)),
        compiler_params=pltpu.CompilerParams(
            dimension_semantics=("parallel",)),
    )(xo, w1p, b1p, w2bd, b2p)


# ---------------------------------------------------------------------------
# Glue: localized spatial-temporal graph construction (matches _construct_adj)
# ---------------------------------------------------------------------------
def construct_adj(A, steps=3):
    N = A.shape[0]
    adj = jnp.zeros((N * steps, N * steps), jnp.float32)
    for i in range(steps):
        adj = adj.at[i * N:(i + 1) * N, i * N:(i + 1) * N].set(A)
    idx = jnp.arange(N)
    for k in range(steps - 1):
        adj = adj.at[k * N + idx, (k + 1) * N + idx].set(1.0)
        adj = adj.at[(k + 1) * N + idx, k * N + idx].set(1.0)
    diag = jnp.arange(N * steps)
    adj = adj.at[diag, diag].set(1.0)
    return adj


# ---------------------------------------------------------------------------
# Parameters (deterministic synthetic init)
# ---------------------------------------------------------------------------
def init_params(key, *, in_dim, in_len, out_len, n_layers, h_dim, gcn_depth,
                n_series):
    keys = jax.random.split(key, 4)
    p = {}
    p["in_lin_w"] = 0.1 * jax.random.normal(keys[0], (in_dim, h_dim), jnp.float32)
    p["in_lin_b"] = 0.1 * jax.random.normal(keys[1], (h_dim,), jnp.float32)
    p["mask"] = jax.random.uniform(keys[2], (3 * n_series, 3 * n_series),
                                   jnp.float32)
    p["layers"] = []
    kk = keys[3]
    T = in_len
    for _ in range(n_layers):
        kk, *ks = jax.random.split(kk, 7)
        T_out = T - 2
        p["layers"].append(dict(
            t_emb=0.1 * jax.random.normal(ks[0], (T, 1, h_dim), jnp.float32),
            s_emb=0.1 * jax.random.normal(ks[1], (1, n_series, h_dim), jnp.float32),
            wl=0.1 * jax.random.normal(ks[2], (T_out, gcn_depth, h_dim, h_dim), jnp.float32),
            wr=0.1 * jax.random.normal(ks[3], (T_out, gcn_depth, h_dim, h_dim), jnp.float32),
            bl=0.1 * jax.random.normal(ks[4], (T_out, gcn_depth, 1, h_dim), jnp.float32),
            br=0.1 * jax.random.normal(ks[5], (T_out, gcn_depth, 1, h_dim), jnp.float32),
        ))
        T = T_out
    D = T * h_dim
    kk, k1, k2, k3, k4 = jax.random.split(kk, 5)
    p["head_w1"] = 0.1 * jax.random.normal(k1, (out_len, D, 128), jnp.float32)
    p["head_b1"] = 0.1 * jax.random.normal(k2, (out_len, 128), jnp.float32)
    p["head_w2"] = 0.1 * jax.random.normal(k3, (out_len, 128, 1), jnp.float32)
    p["head_b2"] = 0.1 * jax.random.normal(k4, (out_len,), jnp.float32)
    return p


# ---------------------------------------------------------------------------
# Full STSGCN forward
# ---------------------------------------------------------------------------
def stsgcn_forward(x, A0, params, *, n_layers, h_dim, gcn_depth, n_series,
                   out_len, act):
    B, P, N, Cin = x.shape
    hd = h_dim

    # 1) input projection + ReLU; batch is pre-folded into the lane axis so no
    #    post-projection transpose of the (larger) projected activation.
    xt = jnp.transpose(x, (1, 2, 0, 3)).reshape(P * N * B, Cin)   # rows=(t,n,b)
    xt = xt.astype(jnp.float32)
    xh = linear2d(xt, params["in_lin_w"], params["in_lin_b"], relu=True)
    xh = xh.reshape(P, N, B * hd)                                 # lane = b*h+k

    # 2) masked localized spatial-temporal adjacency (3N, 3N) -- NO kron(A,I_B)
    A = params["mask"] * construct_adj(A0, 3)

    # 3) STSGCL layers (each shrinks time by 2); embeddings (tiled over B on
    #    the lane axis) are added inside the kernel.
    T = P
    for l in range(n_layers):
        layer = params["layers"][l]
        temb = jnp.tile(layer["t_emb"], (1, 1, B))                # (T, 1, B*h)
        semb = jnp.tile(layer["s_emb"], (1, 1, B))                # (1, N, B*h)
        xh = stsgcl_layer(xh, temb, semb, A, layer["wl"], layer["wr"],
                          layer["bl"], layer["br"],
                          T=T, n_series=N, batch=B,
                          gcn_depth=gcn_depth, h_dim=hd, act=act)
        T -= 2

    # 4) fused output heads, lane-dense (B*N, Q) output.  The reorder below is
    #    a small XLA transpose of the already time-reduced final activation.
    xo = xh.reshape(T, N, B, hd).transpose(2, 1, 0, 3).reshape(B * N, T * hd)
    Q = out_len
    w1p = params["head_w1"].transpose(1, 0, 2).reshape(T * hd, Q * 128)
    b1p = params["head_b1"].reshape(1, Q * 128)
    w2bd = (params["head_w2"][:, :, 0][:, :, None] *
            jnp.eye(Q, dtype=jnp.float32)[:, None, :]).reshape(Q * 128, Q)
    b2p = params["head_b2"].reshape(1, Q)
    y = output_heads(xo, w1p, b1p, w2bd, b2p)                     # (B*N, Q)
    return y.reshape(B, N, Q).transpose(0, 2, 1)                  # (B, Q, N)


# ---------------------------------------------------------------------------
if __name__ == "__main__":
    B, P, N, Cin = 2, 8, 8, 2
    h_dim, n_layers, gcn_depth, out_len = 64, 2, 2, 4
    act = "glu"  # set to 'relu' to match a relu-activated STSGCM

    key = jax.random.PRNGKey(0)
    kx, ka, kp = jax.random.split(key, 3)
    x = jax.random.normal(kx, (B, P, N, Cin), jnp.float32)        # (B, P, N, C)
    A0 = (jax.random.uniform(ka, (N, N)) < 0.3).astype(jnp.float32)
    A0 = jnp.maximum(A0, A0.T)

    params = init_params(kp, in_dim=Cin, in_len=P, out_len=out_len,
                         n_layers=n_layers, h_dim=h_dim,
                         gcn_depth=gcn_depth, n_series=N)

    out = stsgcn_forward(x, A0, params, n_layers=n_layers, h_dim=h_dim,
                         gcn_depth=gcn_depth, n_series=N, out_len=out_len,
                         act=act)
    out = jax.block_until_ready(out)
    assert out.shape == (B, out_len, N), out.shape
    assert bool(jnp.all(jnp.isfinite(out)))
    print("KERNEL_OK")
</pallas_src>

<mosaic_0001>
module attributes {stable_mosaic.version = 11 : i64} {
  func.func @_linear_kernel(%arg0: i32, %arg1: memref<128x2xf32, #tpu.memory_space<vmem>>, %arg2: memref<2x64xf32, #tpu.memory_space<vmem>>, %arg3: memref<1x64xf32, #tpu.memory_space<vmem>>, %arg4: memref<128x64xf32, #tpu.memory_space<vmem>>) attributes {dimension_semantics = [#tpu.dimension_semantics<parallel>], iteration_bounds = array<i64: 1>, scalar_prefetch = 0 : i64, scratch_operands = 0 : i64, tpu.core_type = #tpu.core_type<tc>, window_params = [{transform_indices = @transform_0, window_bounds = array<i64: 128, 2>}, {pipeline_mode = #tpu.pipeline_mode<synchronous>, transform_indices = @transform_1, window_bounds = array<i64: 2, 64>}, {pipeline_mode = #tpu.pipeline_mode<synchronous>, transform_indices = @transform_2, window_bounds = array<i64: 1, 64>}, {transform_indices = @transform_3, window_bounds = array<i64: 128, 64>}]} {
    %c0 = arith.constant 0 : index
    %c0_0 = arith.constant 0 : index
    %0 = vector.load %arg1[%c0, %c0_0] : memref<128x2xf32, #tpu.memory_space<vmem>>, vector<128x2xf32>
    %c0_1 = arith.constant 0 : index
    %c0_2 = arith.constant 0 : index
    %1 = vector.load %arg2[%c0_1, %c0_2] : memref<2x64xf32, #tpu.memory_space<vmem>>, vector<2x64xf32>
    %cst = arith.constant dense<0.000000e+00> : vector<128x64xf32>
    %2 = tpu.matmul %0, %1, %cst {dimension_numbers = #tpu.dot_dimension_numbers<[1], [0], [0], [1], [0, 0, 1, 1], [], []>} : vector<128x2xf32>, vector<2x64xf32>, vector<128x64xf32> -> vector<128x64xf32>
    %c0_3 = arith.constant 0 : index
    %c0_4 = arith.constant 0 : index
    %3 = vector.load %arg3[%c0_3, %c0_4] : memref<1x64xf32, #tpu.memory_space<vmem>>, vector<1x64xf32>
    %4 = vector.broadcast %3 : vector<1x64xf32> to vector<128x64xf32>
    %5 = arith.addf %2, %4 : vector<128x64xf32>
    %cst_5 = arith.constant 0.000000e+00 : f32
    %6 = vector.broadcast %cst_5 : f32 to vector<128x64xf32>
    %7 = arith.maximumf %5, %6 : vector<128x64xf32>
    %c0_6 = arith.constant 0 : index
    %c0_7 = arith.constant 0 : index
    %8 = vector.load %arg4[%c0_6, %c0_7] : memref<128x64xf32, #tpu.memory_space<vmem>>, vector<128x64xf32>
    tpu.vector_store %arg4[%c0_6, %c0_7], %7 {strides = array<i32>} : memref<128x64xf32, #tpu.memory_space<vmem>>, vector<128x64xf32>,
    return
  }
  func.func @transform_0(%arg0: i32) -> (i32, i32) {
    %c0_i32 = arith.constant 0 : i32
    %c0_i32_0 = arith.constant 0 : i32
    return %arg0, %c0_i32 : i32, i32
  }
  func.func @transform_1(%arg0: i32) -> (i32, i32) {
    %c0_i32 = arith.constant 0 : i32
    %c0_i32_0 = arith.constant 0 : i32
    %c0_i32_1 = arith.constant 0 : i32
    return %c0_i32, %c0_i32_0 : i32, i32
  }
  func.func @transform_2(%arg0: i32) -> (i32, i32) {
    %c0_i32 = arith.constant 0 : i32
    %c0_i32_0 = arith.constant 0 : i32
    %c0_i32_1 = arith.constant 0 : i32
    return %c0_i32, %c0_i32_0 : i32, i32
  }
  func.func @transform_3(%arg0: i32) -> (i32, i32) {
    %c0_i32 = arith.constant 0 : i32
    %c0_i32_0 = arith.constant 0 : i32
    return %arg0, %c0_i32 : i32, i32
  }
}

</mosaic_0001>

<llo_original>
// kernel: tpu_custom_call.1
$region0: #{tpu_custom_call.1}
  #allocation0 [shape = 'u32[]', space=smem, size = 0x4, offset = 0x4, fixed_abs, tag = 'smem constant byte address 0x4 - core index']
  #allocation1 [shape = 'u32[144,128]{1,0:T(1,128)}', space=vmem, size = 0x12000, scoped, tag = 'internal scratch']
  %s0 = inlined_call_operand.vmem [shape: f32[128,2], index: 0, kind: input, shape index: {}]
  %s1 = inlined_call_operand.vmem [shape: f32[2,64], index: 1, kind: input, shape index: {}]
  %s2 = inlined_call_operand.vmem [shape: f32[1,64], index: 2, kind: input, shape index: {}]
  %s3 = inlined_call_operand.vmem [shape: f32[128,64], index: 3, kind: output, shape index: {}]
  %s4 = sld [smem:[#allocation0]]
  $region22: #{tpu_custom_call.1} parent=0
    _
  %s6 = ssub.s32 1, %s4
  %s7 = scalar_select 0, %s6, %s4
  // Predicated region
  $region2: #{tpu_custom_call.1} parent=0 // pred_check
    _
  $region3: #{tpu_custom_call.1} parent=0 // pred_check_branch
    %9 = sbr.rel (0) target = $region5
  $region4: #{tpu_custom_call.1} parent=0 // pred_region
    _
  $region5: #{tpu_custom_call.1} parent=0 // pred_fallthru
    _
  // Predicated region
  $region6: #{tpu_custom_call.1} parent=0 // pred_check
    _
  $region7: #{tpu_custom_call.1} parent=0 // pred_check_branch
    %11 = sbr.rel (0) target = $region9
  $region8: #{tpu_custom_call.1} parent=0 // pred_region
    _
  $region9: #{tpu_custom_call.1} parent=0 // pred_fallthru
    _
  // Predicated region
  $region10: #{tpu_custom_call.1} parent=0 // pred_check
    _
  $region11: #{tpu_custom_call.1} parent=0 // pred_check_branch
    %13 = sbr.rel (0) target = $region13
  $region12: #{tpu_custom_call.1} parent=0 // pred_region
    _
  $region13: #{tpu_custom_call.1} parent=0 // pred_fallthru
    _
  %v14 = vld [vmem:[%s0] sm:$0xff]
  %v15 = vld [vmem:[%s0 + $0x8] sm:$0xff]
  %v16 = vld [vmem:[%s0 + $0x10] sm:$0xff]
  %v17 = vld [vmem:[%s0 + $0x18] sm:$0xff]
  %v18 = vld [vmem:[%s0 + $0x20] sm:$0xff]
  %v19 = vld [vmem:[%s0 + $0x28] sm:$0xff]
  %v20 = vld [vmem:[%s0 + $0x30] sm:$0xff]
  %v21 = vld [vmem:[%s0 + $0x38] sm:$0xff]
  %v22 = vld [vmem:[%s0 + $0x40] sm:$0xff]
  %v23 = vld [vmem:[%s0 + $0x48] sm:$0xff]
  %v24 = vld [vmem:[%s0 + $0x50] sm:$0xff]
  %v25 = vld [vmem:[%s0 + $0x58] sm:$0xff]
  %v26 = vld [vmem:[%s0 + $0x60] sm:$0xff]
  %v27 = vld [vmem:[%s0 + $0x68] sm:$0xff]
  %v28 = vld [vmem:[%s0 + $0x70] sm:$0xff]
  %v29 = vld [vmem:[%s0 + $0x78] sm:$0xff]
  %v30 = vld [vmem:[%s1] sm:$0x3]
  %v31 = vld [vmem:[%s2] sm:$0x1]
  %v33 = vlaneseq
  %v34 = vshrl.u32 %v33, 7
  %v35 = vsub.s32 0, %v34
  %v36 = vrot.slane %v31, %v35
  %vm38 = vcmask 15360
  %v40 = vsel %vm38, %v14, 0
  %v43 = vsel %vm38, %v15, 0
  %v46 = vsel %vm38, %v16, 0
  %v49 = vsel %vm38, %v17, 0
  %v52 = vsel %vm38, %v18, 0
  %v55 = vsel %vm38, %v19, 0
  %v58 = vsel %vm38, %v20, 0
  %v61 = vsel %vm38, %v21, 0
  %v64 = vsel %vm38, %v22, 0
  %v67 = vsel %vm38, %v23, 0
  %v70 = vsel %vm38, %v24, 0
  %v73 = vsel %vm38, %v25, 0
  %v76 = vsel %vm38, %v26, 0
  %v79 = vsel %vm38, %v27, 0
  %v82 = vsel %vm38, %v28, 0
  %v85 = vsel %vm38, %v29, 0
  %vm87 = vcmask 1041408
  %v89 = vsel %vm87, %v30, 0
  %91 = vmatprep.subr.mxu0 0.0
  %92 = vmatpush1.msra.mxu0 %v89
  %93 = vmatprep.subr.mxu0 0.0
  %94 = vmatpush1.msra.mxu0 0.0
  %95 = vmatprep.subr.mxu0 0.0
  %96 = vmatpush1.msra.mxu0 0.0
  %97 = vmatprep.subr.mxu0 0.0
  %98 = vmatpush1.msra.mxu0 0.0
  %99 = vmatprep.subr.mxu0 0.0
  %100 = vmatpush1.msra.mxu0 0.0
  %101 = vmatprep.subr.mxu0 0.0
  %102 = vmatpush1.msra.mxu0 0.0
  %103 = vmatprep.subr.mxu0 0.0
  %104 = vmatpush1.msra.mxu0 0.0
  %105 = vmatprep.subr.mxu0 0.0
  %106 = vmatpush1.msra.mxu0 0.0
  %107 = vmatprep.subr.mxu0 0.0
  %108 = vmatpush1.msra.mxu0 0.0
  %109 = vmatprep.subr.mxu0 0.0
  %110 = vmatpush1.msra.mxu0 0.0
  %111 = vmatprep.subr.mxu0 0.0
  %112 = vmatpush1.msra.mxu0 0.0
  %113 = vmatprep.subr.mxu0 0.0
  %114 = vmatpush1.msra.mxu0 0.0
  %115 = vmatprep.subr.mxu0 0.0
  %116 = vmatpush1.msra.mxu0 0.0
  %117 = vmatprep.subr.mxu0 0.0
  %118 = vmatpush1.msra.mxu0 0.0
  %119 = vmatprep.subr.mxu0 0.0
  %120 = vmatpush1.msra.mxu0 0.0
  %121 = vmatprep.subr.mxu0 0.0
  %122 = vmatpush1.msra.mxu0 0.0
  %123 = vmatprep.subr.mxu0 0.0
  %124 = vmatpush1.msra.mxu0 0.0
  %125 = vmatprep.subr.mxu0 0.0
  %126 = vmatpush1.msra.mxu0 0.0
  %127 = vmatprep.subr.mxu0 0.0
  %128 = vmatpush1.msra.mxu0 0.0
  %129 = vmatprep.subr.mxu0 0.0
  %130 = vmatpush1.msra.mxu0 0.0
  %131 = vmatprep.subr.mxu0 0.0
  %132 = vmatpush1.msra.mxu0 0.0
  %133 = vmatprep.subr.mxu0 0.0
  %134 = vmatpush1.msra.mxu0 0.0
  %135 = vmatprep.subr.mxu0 0.0
  %136 = vmatpush1.msra.mxu0 0.0
  %137 = vmatprep.subr.mxu0 0.0
  %138 = vmatpush1.msra.mxu0 0.0
  %139 = vmatprep.subr.mxu0 0.0
  %140 = vmatpush1.msra.mxu0 0.0
  %141 = vmatprep.subr.mxu0 0.0
  %142 = vmatpush1.msra.mxu0 0.0
  %143 = vmatprep.subr.mxu0 0.0
  %144 = vmatpush1.msra.mxu0 0.0
  %145 = vmatprep.subr.mxu0 0.0
  %146 = vmatpush1.msra.mxu0 0.0
  %147 = vmatprep.subr.mxu0 0.0
  %148 = vmatpush1.msra.mxu0 0.0
  %149 = vmatprep.subr.mxu0 0.0
  %150 = vmatpush1.msra.mxu0 0.0
  %151 = vmatprep.subr.mxu0 0.0
  %152 = vmatpush1.msra.mxu0 0.0
  %153 = vmatprep.subr.mxu0 0.0
  %154 = vmatpush1.msra.mxu0 0.0
  %155 = vmatprep.mubr.f32.mxu0 0.0
  %156 = vmatmul.mubr.f32.gmra.mrb[0].mxu0 %v40
  %v157 = vpop.f32.mrb[0].mxu0
  %v158 = vadd.f32 %v36, %v157
  %v159 = vpop.f32.mrb[0].mxu0
  %160 = vmatprep.mubr.f32.mxu0 0.0
  %161 = vmatmul.mubr.f32.gmra.mrb[0].mxu0 %v43
  %v162 = vpop.f32.mrb[0].mxu0
  %v163 = vadd.f32 %v36, %v162
  %v164 = vpop.f32.mrb[0].mxu0
  %165 = vmatprep.mubr.f32.mxu0 0.0
  %166 = vmatmul.mubr.f32.gmra.mrb[0].mxu0 %v46
  %v167 = vpop.f32.mrb[0].mxu0
  %v168 = vadd.f32 %v36, %v167
  %v169 = vpop.f32.mrb[0].mxu0
  %170 = vmatprep.mubr.f32.mxu0 0.0
  %171 = vmatmul.mubr.f32.gmra.mrb[0].mxu0 %v49
  %v172 = vpop.f32.mrb[0].mxu0
  %v173 = vadd.f32 %v36, %v172
  %v174 = vpop.f32.mrb[0].mxu0
  %175 = vmatprep.mubr.f32.mxu0 0.0
  %176 = vmatmul.mubr.f32.gmra.mrb[0].mxu0 %v52
  %v177 = vpop.f32.mrb[0].mxu0
  %v178 = vadd.f32 %v36, %v177
  %v179 = vpop.f32.mrb[0].mxu0
  %180 = vmatprep.mubr.f32.mxu0 0.0
  %181 = vmatmul.mubr.f32.gmra.mrb[0].mxu0 %v55
  %v182 = vpop.f32.mrb[0].mxu0
  %v183 = vadd.f32 %v36, %v182
  %v184 = vpop.f32.mrb[0].mxu0
  %185 = vmatprep.mubr.f32.mxu0 0.0
  %186 = vmatmul.mubr.f32.gmra.mrb[0].mxu0 %v58
  %v187 = vpop.f32.mrb[0].mxu0
  %v188 = vadd.f32 %v36, %v187
  %v189 = vpop.f32.mrb[0].mxu0
  %190 = vmatprep.mubr.f32.mxu0 0.0
  %191 = vmatmul.mubr.f32.gmra.mrb[0].mxu0 %v61
  %v192 = vpop.f32.mrb[0].mxu0
  %v193 = vadd.f32 %v36, %v192
  %v194 = vpop.f32.mrb[0].mxu0
  %195 = vmatprep.mubr.f32.mxu0 0.0
  %196 = vmatmul.mubr.f32.gmra.mrb[0].mxu0 %v64
  %v197 = vpop.f32.mrb[0].mxu0
  %v198 = vadd.f32 %v36, %v197
  %v199 = vpop.f32.mrb[0].mxu0
  %200 = vmatprep.mubr.f32.mxu0 0.0
  %201 = vmatmul.mubr.f32.gmra.mrb[0].mxu0 %v67
  %v202 = vpop.f32.mrb[0].mxu0
  %v203 = vadd.f32 %v36, %v202
  %v204 = vpop.f32.mrb[0].mxu0
  %205 = vmatprep.mubr.f32.mxu0 0.0
  %206 = vmatmul.mubr.f32.gmra.mrb[0].mxu0 %v70
  %v207 = vpop.f32.mrb[0].mxu0
  %v208 = vadd.f32 %v36, %v207
  %v209 = vpop.f32.mrb[0].mxu0
  %210 = vmatprep.mubr.f32.mxu0 0.0
  %211 = vmatmul.mubr.f32.gmra.mrb[0].mxu0 %v73
  %v212 = vpop.f32.mrb[0].mxu0
  %v213 = vadd.f32 %v36, %v212
  %v214 = vpop.f32.mrb[0].mxu0
  %215 = vmatprep.mubr.f32.mxu0 0.0
  %216 = vmatmul.mubr.f32.gmra.mrb[0].mxu0 %v76
  %v217 = vpop.f32.mrb[0].mxu0
  %v218 = vadd.f32 %v36, %v217
  %v219 = vpop.f32.mrb[0].mxu0
  %220 = vmatprep.mubr.f32.mxu0 0.0
  %221 = vmatmul.mubr.f32.gmra.mrb[0].mxu0 %v79
  %v222 = vpop.f32.mrb[0].mxu0
  %v223 = vadd.f32 %v36, %v222
  %v224 = vpop.f32.mrb[0].mxu0
  %225 = vmatprep.mubr.f32.mxu0 0.0
  %226 = vmatmul.mubr.f32.gmra.mrb[0].mxu0 %v82
  %v227 = vpop.f32.mrb[0].mxu0
  %v228 = vadd.f32 %v36, %v227
  %v229 = vpop.f32.mrb[0].mxu0
  %230 = vmatprep.mubr.f32.mxu0 0.0
  %231 = vmatmul.mubr.f32.gmra.mrb[0].mxu0 %v85
  %v232 = vpop.f32.mrb[0].mxu0
  %v233 = vadd.f32 %v36, %v232
  %v234 = vpop.f32.mrb[0].mxu0
  %235 = vdwg.mxu0
  %v236 = vmax.f32 %v158, 0.0
  %v237 = vmax.f32 %v163, 0.0
  %v238 = vmax.f32 %v168, 0.0
  %v239 = vmax.f32 %v173, 0.0
  %v240 = vmax.f32 %v178, 0.0
  %v241 = vmax.f32 %v183, 0.0
  %v242 = vmax.f32 %v188, 0.0
  %v243 = vmax.f32 %v193, 0.0
  %v244 = vmax.f32 %v198, 0.0
  %v245 = vmax.f32 %v203, 0.0
  %v246 = vmax.f32 %v208, 0.0
  %v247 = vmax.f32 %v213, 0.0
  %v248 = vmax.f32 %v218, 0.0
  %v249 = vmax.f32 %v223, 0.0
  %v250 = vmax.f32 %v228, 0.0
  %v251 = vmax.f32 %v233, 0.0
  %vm252 = vcmask 523264
  %253 = vst.msk [vmem:[%s3] sm:$0xff] %vm252, %v236
  %254 = vst.msk [vmem:[%s3 + $0x8] sm:$0xff] %vm252, %v237
  %255 = vst.msk [vmem:[%s3 + $0x10] sm:$0xff] %vm252, %v238
  %256 = vst.msk [vmem:[%s3 + $0x18] sm:$0xff] %vm252, %v239
  %257 = vst.msk [vmem:[%s3 + $0x20] sm:$0xff] %vm252, %v240
  %258 = vst.msk [vmem:[%s3 + $0x28] sm:$0xff] %vm252, %v241
  %259 = vst.msk [vmem:[%s3 + $0x30] sm:$0xff] %vm252, %v242
  %260 = vst.msk [vmem:[%s3 + $0x38] sm:$0xff] %vm252, %v243
  %261 = vst.msk [vmem:[%s3 + $0x40] sm:$0xff] %vm252, %v244
  %262 = vst.msk [vmem:[%s3 + $0x48] sm:$0xff] %vm252, %v245
  %263 = vst.msk [vmem:[%s3 + $0x50] sm:$0xff] %vm252, %v246
  %264 = vst.msk [vmem:[%s3 + $0x58] sm:$0xff] %vm252, %v247
  %265 = vst.msk [vmem:[%s3 + $0x60] sm:$0xff] %vm252, %v248
  %266 = vst.msk [vmem:[%s3 + $0x68] sm:$0xff] %vm252, %v249
  %267 = vst.msk [vmem:[%s3 + $0x70] sm:$0xff] %vm252, %v250
  %268 = vst.msk [vmem:[%s3 + $0x78] sm:$0xff] %vm252, %v251
  // Predicated region
  $region14: #{tpu_custom_call.1} parent=0 // pred_check
    _
  $region15: #{tpu_custom_call.1} parent=0 // pred_check_branch
    %270 = sbr.rel (0) target = $region17
  $region16: #{tpu_custom_call.1} parent=0 // pred_region
    _
  $region17: #{tpu_custom_call.1} parent=0 // pred_fallthru
    _
  // Predicated region
  $region18: #{tpu_custom_call.1} parent=0 // pred_check
    _
  $region19: #{tpu_custom_call.1} parent=0 // pred_check_branch
    %272 = sbr.rel (0) target = $region21
  $region20: #{tpu_custom_call.1} parent=0 // pred_region
    _
  $region21: #{tpu_custom_call.1} parent=0 // pred_fallthru
    _

</llo_original>
